<compile_context>
chip_gen: v5e
topology: v5e:2x2
jax: 0.10.0
libtpu: 0.0.40
codegen_flags: <defaults>
</compile_context>

<pallas_src>
from functools import partial

import jax
import jax.numpy as jnp
from jax.experimental import pallas as pl
from jax.experimental.pallas import tpu as pltpu


# ----------------------------------------------------------------------------
# helpers
# ----------------------------------------------------------------------------
def _pad_to(n, m):
    return ((n + m - 1) // m) * m


_VMEM_LIMIT = 48 * 1024 * 1024  # < 64 MiB physical on v7x, >> worst-case usage


# ----------------------------------------------------------------------------
# Pallas kernel: full-K bf16 matmul, epilogue fuses BN affine (+residual, ReLU)
# ----------------------------------------------------------------------------
def _matmul_bn_kernel(a_ref, b_ref, s_ref, t_ref, o_ref, *, relu):
    acc = jnp.dot(a_ref[...], b_ref[...], preferred_element_type=jnp.float32)
    y = acc * s_ref[...] + t_ref[...]
    if relu:
        y = jnp.maximum(y, 0.0)
    o_ref[...] = y.astype(o_ref.dtype)


def _matmul_bn_res_kernel(a_ref, b_ref, s_ref, t_ref, r_ref, o_ref, *, relu):
    acc = jnp.dot(a_ref[...], b_ref[...], preferred_element_type=jnp.float32)
    y = acc * s_ref[...] + t_ref[...] + r_ref[...].astype(jnp.float32)
    if relu:
        y = jnp.maximum(y, 0.0)
    o_ref[...] = y.astype(o_ref.dtype)


@partial(jax.jit, static_argnames=("relu", "out_dtype"))
def matmul_affine(a, b, scale, shift, residual=None, *, relu,
                  out_dtype=jnp.bfloat16):
    """out = relu?((A @ B) * scale[N] + shift[N] (+ residual)), bf16 MXU, f32 acc."""
    M, K = a.shape
    _, N = b.shape

    # K is fully resident per tile (no reduction grid axis); pad to 16 only.
    Kp = _pad_to(K, 16)
    # 256-wide N tiles for the v6e/v7x 2x256 MXU; small N stays one 128 block.
    tn = 256 if N >= 256 else _pad_to(N, 128)
    Np = _pad_to(N, tn)
    # M tiles of up to 256 rows.
    Mp8 = _pad_to(max(M, 8), 8)
    if Mp8 <= 256:
        tm, Mp = Mp8, Mp8
    else:
        tm, Mp = 256, _pad_to(M, 256)

    a_p = jnp.pad(a.astype(jnp.bfloat16), ((0, Mp - M), (0, Kp - K)))
    b_p = jnp.pad(b.astype(jnp.bfloat16), ((0, Kp - K), (0, Np - N)))
    s_p = jnp.pad(scale.reshape(1, N).astype(jnp.float32), ((0, 0), (0, Np - N)))
    t_p = jnp.pad(shift.reshape(1, N).astype(jnp.float32), ((0, 0), (0, Np - N)))

    in_specs = [
        pl.BlockSpec((tm, Kp), lambda i, j: (i, 0)),   # A: K-resident row tile
        pl.BlockSpec((Kp, tn), lambda i, j: (0, j)),   # B: K-resident weight tile
        pl.BlockSpec((1, tn), lambda i, j: (0, j)),
        pl.BlockSpec((1, tn), lambda i, j: (0, j)),
    ]
    operands = [a_p, b_p, s_p, t_p]

    if residual is not None:
        r_p = jnp.pad(residual.astype(jnp.bfloat16), ((0, Mp - M), (0, Np - N)))
        in_specs.append(pl.BlockSpec((tm, tn), lambda i, j: (i, j)))
        operands.append(r_p)
        kernel = partial(_matmul_bn_res_kernel, relu=relu)
    else:
        kernel = partial(_matmul_bn_kernel, relu=relu)

    out = pl.pallas_call(
        kernel,
        out_shape=jax.ShapeDtypeStruct((Mp, Np), out_dtype),
        grid=(Mp // tm, Np // tn),
        in_specs=in_specs,
        out_specs=pl.BlockSpec((tm, tn), lambda i, j: (i, j)),
        compiler_params=pltpu.CompilerParams(
            dimension_semantics=("parallel", "parallel"),
            vmem_limit_bytes=_VMEM_LIMIT),
    )(*operands)
    return out[:M, :N]


# ----------------------------------------------------------------------------
# Pallas kernel: global (adaptive 1x1) average pool (f32 accumulate)
# ----------------------------------------------------------------------------
def _avgpool_kernel(x_ref, o_ref):
    o_ref[...] = jnp.mean(x_ref[...].astype(jnp.float32), axis=1)


@jax.jit
def global_avg_pool(x):  # (B, H, W, C) -> (B, C) f32
    B, H, W, C = x.shape
    xf = x.reshape(B, H * W, C)
    return pl.pallas_call(
        _avgpool_kernel,
        out_shape=jax.ShapeDtypeStruct((B, C), jnp.float32),
        grid=(1,),
        in_specs=[pl.BlockSpec((B, H * W, C), lambda i: (0, 0, 0))],
        out_specs=pl.BlockSpec((B, C), lambda i: (0, 0)),
        compiler_params=pltpu.CompilerParams(vmem_limit_bytes=_VMEM_LIMIT),
    )(xf)


# ----------------------------------------------------------------------------
# 3x3 / stride-2 / pad-1 max pool: fused XLA maximum tree (per perf review,
# avoids materializing a 9x-expanded tensor and any single-block VMEM blowup).
# ----------------------------------------------------------------------------
@jax.jit
def maxpool_3x3_s2(x):  # (B, H, W, C) NHWC
    B, H, W, C = x.shape
    OH = (H + 2 - 3) // 2 + 1
    OW = (W + 2 - 3) // 2 + 1
    xp = jnp.pad(x, ((0, 0), (1, 1), (1, 1), (0, 0)), constant_values=-jnp.inf)
    out = None
    for kh in range(3):
        for kw in range(3):
            v = xp[:, kh:kh + 2 * (OH - 1) + 1:2,
                   kw:kw + 2 * (OW - 1) + 1:2, :]
            out = v if out is None else jnp.maximum(out, v)
    return out


# ----------------------------------------------------------------------------
# Conv (im2col glue) + folded BN (+fused residual/ReLU) via the Pallas matmul
# ----------------------------------------------------------------------------
def conv2d_bn(x, w, scale, shift, *, stride, padding, relu, residual=None):
    # x: (B, H, W, Cin) NHWC bf16 ; w: (KH, KW, Cin, Cout) bf16
    B, H, W, Cin = x.shape
    KH, KW, _, Cout = w.shape
    OH = (H + 2 * padding - KH) // stride + 1
    OW = (W + 2 * padding - KW) // stride + 1
    if KH == 1 and KW == 1 and padding == 0:
        a = x[:, 0:stride * (OH - 1) + 1:stride,
              0:stride * (OW - 1) + 1:stride, :].reshape(B * OH * OW, Cin)
    else:
        xp = jnp.pad(x, ((0, 0), (padding, padding), (padding, padding), (0, 0)))
        cols = []
        for kh in range(KH):
            for kw in range(KW):
                cols.append(xp[:, kh:kh + stride * (OH - 1) + 1:stride,
                               kw:kw + stride * (OW - 1) + 1:stride, :])
        patches = jnp.stack(cols, axis=3)             # (B, OH, OW, KH*KW, Cin)
        a = patches.reshape(B * OH * OW, KH * KW * Cin)
    b2 = w.reshape(KH * KW * Cin, Cout)
    r2 = None if residual is None else residual.reshape(B * OH * OW, Cout)
    y = matmul_affine(a, b2, scale, shift, r2, relu=relu)   # Pallas hot path
    return y.reshape(B, OH, OW, Cout)


def bottleneck(x, p, stride):
    if "down_w" in p:
        identity = conv2d_bn(x, p["down_w"], p["down_scale"], p["down_shift"],
                             stride=stride, padding=0, relu=False)
    else:
        identity = x
    out = conv2d_bn(x, p["conv1_w"], p["s1"], p["t1"],
                    stride=1, padding=0, relu=True)
    out = conv2d_bn(out, p["conv2_w"], p["s2"], p["t2"],
                    stride=stride, padding=1, relu=True)
    # conv3 epilogue fuses residual add + final ReLU (no standalone kernel).
    out = conv2d_bn(out, p["conv3_w"], p["s3"], p["t3"],
                    stride=1, padding=0, relu=True, residual=identity)
    return out


# ----------------------------------------------------------------------------
# Deterministic parameter init (ResNet-50 shapes); BN folded + weights bf16 here
# ----------------------------------------------------------------------------
def init_bn_folded(key, c, eps=1e-5):
    k1, k2, k3, k4 = jax.random.split(key, 4)
    gamma = 1.0 + 0.1 * jax.random.normal(k1, (c,), jnp.float32)
    beta = 0.1 * jax.random.normal(k2, (c,), jnp.float32)
    mean = 0.1 * jax.random.normal(k3, (c,), jnp.float32)
    var = 0.5 + jax.random.uniform(k4, (c,), jnp.float32)
    scale = gamma / jnp.sqrt(var + eps)
    shift = beta - mean * scale
    return scale, shift


def init_conv(key, kh, kw, cin, cout):
    w = 0.05 * jax.random.normal(key, (kh, kw, cin, cout), jnp.float32)
    return w.astype(jnp.bfloat16)


def init_bottleneck(key, cin, width, stride):
    ks = jax.random.split(key, 8)
    s1, t1 = init_bn_folded(ks[1], width)
    s2, t2 = init_bn_folded(ks[3], width)
    s3, t3 = init_bn_folded(ks[5], 4 * width)
    p = dict(conv1_w=init_conv(ks[0], 1, 1, cin, width), s1=s1, t1=t1,
             conv2_w=init_conv(ks[2], 3, 3, width, width), s2=s2, t2=t2,
             conv3_w=init_conv(ks[4], 1, 1, width, 4 * width), s3=s3, t3=t3)
    if stride != 1 or cin != 4 * width:
        ds, dt = init_bn_folded(ks[7], 4 * width)
        p["down_w"] = init_conv(ks[6], 1, 1, cin, 4 * width)
        p["down_scale"], p["down_shift"] = ds, dt
    return p


def init_encoder(key, embed_size):
    ks = jax.random.split(key, 4)
    s1, t1 = init_bn_folded(ks[1], 64)
    params = dict(conv1_w=init_conv(ks[0], 7, 7, 3, 64), s1=s1, t1=t1)
    stage_defs = [(64, 3, 1), (128, 4, 2), (256, 6, 2), (512, 3, 2)]
    stage_keys = jax.random.split(ks[2], 4)
    layers = []
    cin = 64
    for si, (width, nblocks, stride) in enumerate(stage_defs):
        bkeys = jax.random.split(stage_keys[si], nblocks)
        blocks = []
        for bi in range(nblocks):
            s = stride if bi == 0 else 1
            blocks.append(init_bottleneck(bkeys[bi], cin, width, s))
            cin = 4 * width
        layers.append(blocks)
    params["layers"] = layers
    params["embed_w"] = (0.05 * jax.random.normal(
        ks[3], (2048, embed_size), jnp.float32)).astype(jnp.bfloat16)
    params["embed_b"] = jnp.zeros((embed_size,), jnp.float32)
    return params


# ----------------------------------------------------------------------------
# Forward (matches EncoderCNN.forward: resnet trunk -> flatten -> Linear)
# ----------------------------------------------------------------------------
def encoder_cnn_forward(params, images_nchw):
    # Input is NCHW (PyTorch convention); transpose to NHWC, bf16 activations.
    x = jnp.transpose(images_nchw, (0, 2, 3, 1)).astype(jnp.bfloat16)
    x = conv2d_bn(x, params["conv1_w"], params["s1"], params["t1"],
                  stride=2, padding=3, relu=True)
    x = maxpool_3x3_s2(x)
    stage_strides = [1, 2, 2, 2]
    for si, blocks in enumerate(params["layers"]):
        for bi, bp in enumerate(blocks):
            s = stage_strides[si] if bi == 0 else 1
            x = bottleneck(x, bp, s)
    feat = global_avg_pool(x)                           # (B, 2048) == flatten
    ones = jnp.ones((params["embed_w"].shape[1],), jnp.float32)
    out = matmul_affine(feat, params["embed_w"], ones, params["embed_b"],
                        relu=False, out_dtype=jnp.float32)   # nn.Linear
    return out


if __name__ == "__main__":
    key = jax.random.PRNGKey(0)
    pkey, xkey = jax.random.split(key)
    embed_size = 256
    params = init_encoder(pkey, embed_size)
    images = jax.random.normal(xkey, (2, 3, 64, 64), jnp.float32)  # NCHW
    out = encoder_cnn_forward(params, images)
    out = jax.block_until_ready(out)
    assert out.shape == (2, embed_size)
    assert bool(jnp.all(jnp.isfinite(out)))
    print("KERNEL_OK")
</pallas_src>

<mosaic_0001>
module attributes {stable_mosaic.version = 11 : i64} {
  func.func @_matmul_bn_kernel(%arg0: i32, %arg1: i32, %arg2: memref<256x160xbf16, #tpu.memory_space<vmem>>, %arg3: memref<160x128xbf16, #tpu.memory_space<vmem>>, %arg4: memref<1x128xf32, #tpu.memory_space<vmem>>, %arg5: memref<1x128xf32, #tpu.memory_space<vmem>>, %arg6: memref<256x128xbf16, #tpu.memory_space<vmem>>) attributes {dimension_semantics = [#tpu.dimension_semantics<parallel>, #tpu.dimension_semantics<parallel>], iteration_bounds = array<i64: 8, 1>, scalar_prefetch = 0 : i64, scratch_operands = 0 : i64, tpu.core_type = #tpu.core_type<tc>, window_params = [{transform_indices = @transform_0, window_bounds = array<i64: 256, 160>}, {transform_indices = @transform_1, window_bounds = array<i64: 160, 128>}, {transform_indices = @transform_2, window_bounds = array<i64: 1, 128>}, {transform_indices = @transform_3, window_bounds = array<i64: 1, 128>}, {transform_indices = @transform_4, window_bounds = array<i64: 256, 128>}]} {
    %c0 = arith.constant 0 : index
    %c0_0 = arith.constant 0 : index
    %0 = vector.load %arg2[%c0, %c0_0] : memref<256x160xbf16, #tpu.memory_space<vmem>>, vector<256x160xbf16>
    %c0_1 = arith.constant 0 : index
    %c0_2 = arith.constant 0 : index
    %1 = vector.load %arg3[%c0_1, %c0_2] : memref<160x128xbf16, #tpu.memory_space<vmem>>, vector<160x128xbf16>
    %cst = arith.constant dense<0.000000e+00> : vector<256x128xf32>
    %2 = tpu.matmul %0, %1, %cst {dimension_numbers = #tpu.dot_dimension_numbers<[1], [0], [0], [1], [0, 0, 1, 1], [], []>} : vector<256x160xbf16>, vector<160x128xbf16>, vector<256x128xf32> -> vector<256x128xf32>
    %c0_3 = arith.constant 0 : index
    %c0_4 = arith.constant 0 : index
    %3 = vector.load %arg4[%c0_3, %c0_4] : memref<1x128xf32, #tpu.memory_space<vmem>>, vector<1x128xf32>
    %4 = vector.broadcast %3 : vector<1x128xf32> to vector<256x128xf32>
    %5 = arith.mulf %2, %4 : vector<256x128xf32>
    %c0_5 = arith.constant 0 : index
    %c0_6 = arith.constant 0 : index
    %6 = vector.load %arg5[%c0_5, %c0_6] : memref<1x128xf32, #tpu.memory_space<vmem>>, vector<1x128xf32>
    %7 = vector.broadcast %6 : vector<1x128xf32> to vector<256x128xf32>
    %8 = arith.addf %5, %7 : vector<256x128xf32>
    %cst_7 = arith.constant 0.000000e+00 : f32
    %9 = vector.broadcast %cst_7 : f32 to vector<256x128xf32>
    %10 = arith.maximumf %8, %9 : vector<256x128xf32>
    %11 = arith.truncf %10 : vector<256x128xf32> to vector<256x128xbf16>
    %c0_8 = arith.constant 0 : index
    %c0_9 = arith.constant 0 : index
    %12 = vector.load %arg6[%c0_8, %c0_9] : memref<256x128xbf16, #tpu.memory_space<vmem>>, vector<256x128xbf16>
    tpu.vector_store %arg6[%c0_8, %c0_9], %11 {strides = array<i32>} : memref<256x128xbf16, #tpu.memory_space<vmem>>, vector<256x128xbf16>,
    return
  }
  func.func @transform_0(%arg0: i32, %arg1: i32) -> (i32, i32) {
    %c0_i32 = arith.constant 0 : i32
    %c0_i32_0 = arith.constant 0 : i32
    return %arg0, %c0_i32 : i32, i32
  }
  func.func @transform_1(%arg0: i32, %arg1: i32) -> (i32, i32) {
    %c0_i32 = arith.constant 0 : i32
    %c0_i32_0 = arith.constant 0 : i32
    return %c0_i32, %arg1 : i32, i32
  }
  func.func @transform_2(%arg0: i32, %arg1: i32) -> (i32, i32) {
    %c0_i32 = arith.constant 0 : i32
    %c0_i32_0 = arith.constant 0 : i32
    return %c0_i32, %arg1 : i32, i32
  }
  func.func @transform_3(%arg0: i32, %arg1: i32) -> (i32, i32) {
    %c0_i32 = arith.constant 0 : i32
    %c0_i32_0 = arith.constant 0 : i32
    return %c0_i32, %arg1 : i32, i32
  }
  func.func @transform_4(%arg0: i32, %arg1: i32) -> (i32, i32) {
    %c0_i32 = arith.constant 0 : i32
    return %arg0, %arg1 : i32, i32
  }
}

</mosaic_0001>

<llo_original>
// kernel: matmul_affine.1
$region0: #{matmul_affine.1}
  #allocation0 [shape = 'u32[]', space=smem, size = 0x4, offset = 0x4, fixed_abs, tag = 'smem constant byte address 0x4 - core index']
  #allocation1 [shape = 'u32[72,128]{1,0:T(1,128)}', space=vmem, size = 0x9000, scoped, tag = 'internal scratch']
  %s0 = inlined_call_operand.vmem [shape: bf16[2048,160], index: 0, kind: input, shape index: {}]
  %s1 = inlined_call_operand.vmem [shape: bf16[160,128], index: 1, kind: input, shape index: {}]
  %s2 = inlined_call_operand.vmem [shape: f32[1,128], index: 2, kind: input, shape index: {}]
  %s3 = inlined_call_operand.vmem [shape: f32[1,128], index: 3, kind: input, shape index: {}]
  %s4 = inlined_call_operand.vmem [shape: bf16[2048,128], index: 4, kind: output, shape index: {}]
  %s5 = sld [smem:[#allocation0]]
  $region49: #{matmul_affine.1} parent=0
    _
  %s7 = ssub.s32 1, %s5
  %s8 = scalar_select 0, %s7, %s5
  loop: start=0, step=1, limit=10
  $region2: #{matmul_affine.1} parent=0 // loop_pre_header
    _
  $region3: #{matmul_affine.1} parent=0 // loop_header
    %s10 = sphi 0, %s14
    %p11 = scmp.ge.s32.totalorder %s10, 10
    %s17 = sphi 0, %s29
    %s18 = sphi 0, %s25
    %s19 = sphi 0, %s17
    %s20 = sphi 0, %s18
    %s21 = sphi 0, %s19
    %s22 = sphi 0, %s20
    %s32 = sphi 0, %s34
    %s35 = sphi 0, %s32
    %s36 = sphi 0, %s35
    %s52 = sphi 0, %s36
    %s58 = sphi 0, %s60
    %s61 = sphi 0, %s58
    %s62 = sphi 0, %s61
    %s78 = sphi 0, %s62
    %s84 = sphi 0, %s86
    %s87 = sphi 0, %s84
    %s88 = sphi 0, %s87
    %s104 = sphi 0, %s88
    %s110 = sphi 0, %s112
    %s113 = sphi 0, %s110
    %s114 = sphi 0, %s113
    %s130 = sphi 0, %s114
    %s138 = sphi 0, %s140
    %s141 = sphi 0, %s138
    %s142 = sphi 0, %s141
    %s158 = sphi 0, %s142
  $region4: #{matmul_affine.1} parent=0 // loop_header_branch
    %13 = sbr.rel (%p11) target = $region8
  $region5: #{matmul_affine.1} parent=0 // loop_body
    %s15 = ssub.s32 %s10, 1
    %s16 = ssub.s32 %s10, 2
    %s23 = sadd.s32 1, %s18
    %p24 = scmp.ge.s32.totalorder %s23, 1
    %s25 = scalar_select %p24, 0, %s23
    %s26 = sadd.s32 1, %s17
    %s27 = scalar_select %p24, %s26, %s17
    %p28 = scmp.ge.s32.totalorder %s27, 8
    %s29 = scalar_select %p28, 0, %s27
    %s30 = ssub.s32 %s17, %s29
    %p31 = scmp.eq.s32.totalorder %s30, 0
    %s33 = sadd.s32 %s32, 1
    %s34 = scalar_select %p31, %s32, %s33
    %p37 = pneg %p31
    %p38 = scmp.eq.s32.totalorder %s10, 7
    %p39 = por %p37, %p38
    %p40 = scmp.ne.s32.totalorder %s32, %s35
    %p41 = scmp.eq.s32.totalorder %s10, 0
    %p42 = por %p40, %p41
    %p43 = scmp.ne.s32.totalorder %s32, %s35
    %p44 = scmp.eq.s32.totalorder %s15, 7
    %p45 = por %p43, %p44
    %p46 = scmp.ne.s32.totalorder %s35, %s36
    %p47 = scmp.eq.s32.totalorder %s15, 0
    %p48 = por %p46, %p47
    %p49 = scmp.ne.s32.totalorder %s35, %s36
    %p50 = scmp.eq.s32.totalorder %s16, 7
    %p51 = por %p49, %p50
    %p53 = scmp.ne.s32.totalorder %s36, %s52
    %p54 = scmp.eq.s32.totalorder %s16, 0
    %p55 = por %p53, %p54
    %s56 = ssub.s32 %s18, %s25
    %p57 = scmp.eq.s32.totalorder %s56, 0
    %s59 = sadd.s32 %s58, 1
    %s60 = scalar_select %p57, %s58, %s59
    %p63 = pneg %p57
    %p64 = scmp.eq.s32.totalorder %s10, 7
    %p65 = por %p63, %p64
    %p66 = scmp.ne.s32.totalorder %s58, %s61
    %p67 = scmp.eq.s32.totalorder %s10, 0
    %p68 = por %p66, %p67
    %p69 = scmp.ne.s32.totalorder %s58, %s61
    %p70 = scmp.eq.s32.totalorder %s15, 7
    %p71 = por %p69, %p70
    %p72 = scmp.ne.s32.totalorder %s61, %s62
    %p73 = scmp.eq.s32.totalorder %s15, 0
    %p74 = por %p72, %p73
    %p75 = scmp.ne.s32.totalorder %s61, %s62
    %p76 = scmp.eq.s32.totalorder %s16, 7
    %p77 = por %p75, %p76
    %p79 = scmp.ne.s32.totalorder %s62, %s78
    %p80 = scmp.eq.s32.totalorder %s16, 0
    %p81 = por %p79, %p80
    %s82 = ssub.s32 %s18, %s25
    %p83 = scmp.eq.s32.totalorder %s82, 0
    %s85 = sadd.s32 %s84, 1
    %s86 = scalar_select %p83, %s84, %s85
    %p89 = pneg %p83
    %p90 = scmp.eq.s32.totalorder %s10, 7
    %p91 = por %p89, %p90
    %p92 = scmp.ne.s32.totalorder %s84, %s87
    %p93 = scmp.eq.s32.totalorder %s10, 0
    %p94 = por %p92, %p93
    %p95 = scmp.ne.s32.totalorder %s84, %s87
    %p96 = scmp.eq.s32.totalorder %s15, 7
    %p97 = por %p95, %p96
    %p98 = scmp.ne.s32.totalorder %s87, %s88
    %p99 = scmp.eq.s32.totalorder %s15, 0
    %p100 = por %p98, %p99
    %p101 = scmp.ne.s32.totalorder %s87, %s88
    %p102 = scmp.eq.s32.totalorder %s16, 7
    %p103 = por %p101, %p102
    %p105 = scmp.ne.s32.totalorder %s88, %s104
    %p106 = scmp.eq.s32.totalorder %s16, 0
    %p107 = por %p105, %p106
    %s108 = ssub.s32 %s18, %s25
    %p109 = scmp.eq.s32.totalorder %s108, 0
    %s111 = sadd.s32 %s110, 1
    %s112 = scalar_select %p109, %s110, %s111
    %p115 = pneg %p109
    %p116 = scmp.eq.s32.totalorder %s10, 7
    %p117 = por %p115, %p116
    %p118 = scmp.ne.s32.totalorder %s110, %s113
    %p119 = scmp.eq.s32.totalorder %s10, 0
    %p120 = por %p118, %p119
    %p121 = scmp.ne.s32.totalorder %s110, %s113
    %p122 = scmp.eq.s32.totalorder %s15, 7
    %p123 = por %p121, %p122
    %p124 = scmp.ne.s32.totalorder %s113, %s114
    %p125 = scmp.eq.s32.totalorder %s15, 0
    %p126 = por %p124, %p125
    %p127 = scmp.ne.s32.totalorder %s113, %s114
    %p128 = scmp.eq.s32.totalorder %s16, 7
    %p129 = por %p127, %p128
    %p131 = scmp.ne.s32.totalorder %s114, %s130
    %p132 = scmp.eq.s32.totalorder %s16, 0
    %p133 = por %p131, %p132
    %s134 = ssub.s32 %s17, %s29
    %s135 = ssub.s32 %s18, %s25
    %s136 = sor.u32 %s134, %s135
    %p137 = scmp.eq.s32.totalorder %s136, 0
    %s139 = sadd.s32 %s138, 1
    %s140 = scalar_select %p137, %s138, %s139
    %p143 = pneg %p137
    %p144 = scmp.eq.s32.totalorder %s10, 7
    %p145 = por %p143, %p144
    %p146 = scmp.ne.s32.totalorder %s138, %s141
    %p147 = scmp.eq.s32.totalorder %s10, 0
    %p148 = por %p146, %p147
    %p149 = scmp.ne.s32.totalorder %s138, %s141
    %p150 = scmp.eq.s32.totalorder %s15, 7
    %p151 = por %p149, %p150
    %p152 = scmp.ne.s32.totalorder %s141, %s142
    %p153 = scmp.eq.s32.totalorder %s15, 0
    %p154 = por %p152, %p153
    %p155 = scmp.ne.s32.totalorder %s141, %s142
    %p156 = scmp.eq.s32.totalorder %s16, 7
    %p157 = por %p155, %p156
    %p159 = scmp.ne.s32.totalorder %s142, %s158
    %p160 = scmp.eq.s32.totalorder %s16, 0
    %p161 = por %p159, %p160
    %p162 = scmp.le.s32.totalorder 1, %s10
    %p163 = scmp.lt.s32.totalorder %s10, 9
    %p164 = pnand %p162, %p163
    %p165 = pneg %p164
    // Predicated region
    $region9: #{matmul_affine.1} parent=5 // pred_check
      _
    $region10: #{matmul_affine.1} parent=5 // pred_check_branch
      %167 = sbr.rel (%p164) target = $region12
    $region11: #{matmul_affine.1} parent=5 // pred_region
      %s168 = ssub.s32 %s10, 1
      // Predicated region
      $region13: #{matmul_affine.1} parent=11 // pred_check
        %p169 = pneg %p74
      $region14: #{matmul_affine.1} parent=11 // pred_check_branch
        %171 = sbr.rel (%p169) target = $region16
      $region15: #{matmul_affine.1} parent=11 // pred_region
        %p172 = scmp.lt.s32.totalorder %s20, 0
        %s173 = scalar_select %p172, %s20, 0
        %s174 = smul.addr %s173, 4
        %s175 = scalar_lea.vmem %s1, %s174
      $region16: #{matmul_affine.1} parent=11 // pred_fallthru
        _
      // Predicated region
      $region17: #{matmul_affine.1} parent=11 // pred_check
        %p176 = pneg %p100
      $region18: #{matmul_affine.1} parent=11 // pred_check_branch
        %178 = sbr.rel (%p176) target = $region20
      $region19: #{matmul_affine.1} parent=11 // pred_region
        %p179 = scmp.lt.s32.totalorder %s20, 0
        %s180 = scalar_select %p179, %s20, 0
        %s181 = scalar_lea.vmem %s2, %s180
      $region20: #{matmul_affine.1} parent=11 // pred_fallthru
        _
      // Predicated region
      $region21: #{matmul_affine.1} parent=11 // pred_check
        %p182 = pneg %p126
      $region22: #{matmul_affine.1} parent=11 // pred_check_branch
        %184 = sbr.rel (%p182) target = $region24
      $region23: #{matmul_affine.1} parent=11 // pred_region
        %p185 = scmp.lt.s32.totalorder %s20, 0
        %s186 = scalar_select %p185, %s20, 0
        %s187 = scalar_lea.vmem %s3, %s186
      $region24: #{matmul_affine.1} parent=11 // pred_fallthru
        _
    $region12: #{matmul_affine.1} parent=5 // pred_fallthru
      _
    %p188 = scmp.lt.s32.totalorder %s10, 8
    // Predicated region
    $region25: #{matmul_affine.1} parent=5 // pred_check
      %p189 = pneg %p188
    $region26: #{matmul_affine.1} parent=5 // pred_check_branch
      %191 = sbr.rel (%p189) target = $region28
    $region27: #{matmul_affine.1} parent=5 // pred_region
      // Predicated region
      $region29: #{matmul_affine.1} parent=27 // pred_check
        %p192 = pneg %p42
      $region30: #{matmul_affine.1} parent=27 // pred_check_branch
        %194 = sbr.rel (%p192) target = $region32
      $region31: #{matmul_affine.1} parent=27 // pred_region
        %s195 = smul.u32 32, %s17
        %p196 = scmp.lt.s32.totalorder %s195, 255
        %s197 = scalar_select %p196, %s195, 255
        %s198 = smul.addr %s197, 2
        %s199 = smul.addr %s198, 4
        %s200 = scalar_lea.vmem %s0, %s199
        %s201 = smul.u32 32, %s17
      $region32: #{matmul_affine.1} parent=27 // pred_fallthru
        _
    $region28: #{matmul_affine.1} parent=5 // pred_fallthru
      _
    %p202 = scmp.le.s32.totalorder 1, %s10
    %p203 = scmp.lt.s32.totalorder %s10, 9
    %p204 = pnand %p202, %p203
    %p205 = pneg %p204
    // Predicated region
    $region33: #{matmul_affine.1} parent=5 // pred_check
      _
    $region34: #{matmul_affine.1} parent=5 // pred_check_branch
      %207 = sbr.rel (%p204) target = $region36
    $region35: #{matmul_affine.1} parent=5 // pred_region
      %s208 = ssub.s32 %s10, 1
      %s209 = smul.u32 32, %s19
      %p210 = scmp.lt.s32.totalorder %s209, 255
      %s211 = scalar_select %p210, %s209, 255
      %s212 = smul.addr %s211, 2
      %s213 = smul.addr %s212, 4
      %s214 = scalar_lea.vmem %s0, %s213
      %p215 = pneg %p48
      %p216 = pneg %p45
      %p217 = scmp.lt.s32.totalorder %s20, 0
      %s218 = scalar_select %p217, %s20, 0
      %s219 = smul.addr %s218, 4
      %s220 = scalar_lea.vmem %s1, %s219
      %p221 = pneg %p74
      %p222 = pneg %p71
      %p223 = scmp.lt.s32.totalorder %s20, 0
      %s224 = scalar_select %p223, %s20, 0
      %s225 = scalar_lea.vmem %s2, %s224
      %p226 = pneg %p100
      %p227 = pneg %p97
      %p228 = scmp.lt.s32.totalorder %s20, 0
      %s229 = scalar_select %p228, %s20, 0
      %s230 = scalar_lea.vmem %s3, %s229
      %p231 = pneg %p126
      %p232 = pneg %p123
      %p233 = pneg %p154
      %p234 = pneg %p151
      %s235 = smul.u32 32, %s19
      %p236 = scmp.lt.s32.totalorder %s235, 255
      %s237 = scalar_select %p236, %s235, 255
      %p238 = scmp.lt.s32.totalorder %s20, 0
      %s239 = scalar_select %p238, %s20, 0
      %s240 = sadd.s32 %s239, %s237
      %s241 = smul.addr %s240, 4
      %s242 = scalar_lea.vmem %s4, %s241
      %s243 = smul.u32 32, %s19
      %p244 = scmp.lt.s32.totalorder %s243, 255
      %s245 = scalar_select %p244, %s243, 255
      %s246 = smul.addr %s245, 2
      %s247 = smul.addr %s246, 4
      %s248 = scalar_lea.vmem %s0, %s247
      %s249 = smul.u32 32, %s19
      %p250 = scmp.lt.s32.totalorder %s20, 0
      %s251 = scalar_select %p250, %s20, 0
      %s252 = smul.addr %s251, 4
      %s253 = scalar_lea.vmem %s1, %s252
      %p254 = scmp.lt.s32.totalorder %s20, 0
      %s255 = scalar_select %p254, %s20, 0
      %s256 = scalar_lea.vmem %s2, %s255
      %p257 = scmp.lt.s32.totalorder %s20, 0
      %s258 = scalar_select %p257, %s20, 0
      %s259 = scalar_lea.vmem %s3, %s258
      %s260 = smul.u32 32, %s19
      %p261 = scmp.lt.s32.totalorder %s260, 255
      %s262 = scalar_select %p261, %s260, 255
      %p263 = scmp.lt.s32.totalorder %s20, 0
      %s264 = scalar_select %p263, %s20, 0
      %s265 = sadd.s32 %s264, %s262
      %s266 = smul.addr %s265, 4
      %s267 = scalar_lea.vmem %s4, %s266
      %s268 = smul.u32 32, %s19
      %v270 = vld [vmem:[%s248] sm:$0xff]
      %v271 = vld [vmem:[%s248 + $0x8] sm:$0xff]
      %v272 = vld [vmem:[%s248 + $0x10] sm:$0xff]
      %v273 = vld [vmem:[%s248 + $0x18] sm:$0xff]
      %v274 = vld [vmem:[%s248 + $0x20] sm:$0xff]
      %v275 = vld [vmem:[%s248 + $0x28] sm:$0xff]
      %v276 = vld [vmem:[%s248 + $0x30] sm:$0xff]
      %v277 = vld [vmem:[%s248 + $0x38] sm:$0xff]
      %v278 = vld [vmem:[%s248 + $0x40] sm:$0xff]
      %v279 = vld [vmem:[%s248 + $0x48] sm:$0xff]
      %v280 = vld [vmem:[%s248 + $0x50] sm:$0xff]
      %v281 = vld [vmem:[%s248 + $0x58] sm:$0xff]
      %v282 = vld [vmem:[%s248 + $0x60] sm:$0xff]
      %v283 = vld [vmem:[%s248 + $0x68] sm:$0xff]
      %v284 = vld [vmem:[%s248 + $0x70] sm:$0xff]
      %v285 = vld [vmem:[%s248 + $0x78] sm:$0xff]
      %v286 = vld [vmem:[%s248 + $0x80] sm:$0xff]
      %v287 = vld [vmem:[%s248 + $0x88] sm:$0xff]
      %v288 = vld [vmem:[%s248 + $0x90] sm:$0xff]
      %v289 = vld [vmem:[%s248 + $0x98] sm:$0xff]
      %v290 = vld [vmem:[%s248 + $0xa0] sm:$0xff]
      %v291 = vld [vmem:[%s248 + $0xa8] sm:$0xff]
      %v292 = vld [vmem:[%s248 + $0xb0] sm:$0xff]
      %v293 = vld [vmem:[%s248 + $0xb8] sm:$0xff]
      %v294 = vld [vmem:[%s248 + $0xc0] sm:$0xff]
      %v295 = vld [vmem:[%s248 + $0xc8] sm:$0xff]
      %v296 = vld [vmem:[%s248 + $0xd0] sm:$0xff]
      %v297 = vld [vmem:[%s248 + $0xd8] sm:$0xff]
      %v298 = vld [vmem:[%s248 + $0xe0] sm:$0xff]
      %v299 = vld [vmem:[%s248 + $0xe8] sm:$0xff]
      %v300 = vld [vmem:[%s248 + $0xf0] sm:$0xff]
      %v301 = vld [vmem:[%s248 + $0xf8] sm:$0xff]
      %v302 = vld [vmem:[%s253] sm:$0xf]
      %v303 = vld [vmem:[%s253 + $0x4] sm:$0xf]
      %v304 = vld [vmem:[%s253 + $0x8] sm:$0xf]
      %v305 = vld [vmem:[%s253 + $0xc] sm:$0xf]
      %v306 = vld [vmem:[%s253 + $0x10] sm:$0xf]
      %v307 = vld [vmem:[%s253 + $0x14] sm:$0xf]
      %v308 = vld [vmem:[%s253 + $0x18] sm:$0xf]
      %v309 = vld [vmem:[%s253 + $0x1c] sm:$0xf]
      %v310 = vld [vmem:[%s253 + $0x20] sm:$0xf]
      %v311 = vld [vmem:[%s253 + $0x24] sm:$0xf]
      %v312 = vld [vmem:[%s253 + $0x28] sm:$0xf]
      %v313 = vld [vmem:[%s253 + $0x2c] sm:$0xf]
      %v314 = vld [vmem:[%s253 + $0x30] sm:$0xf]
      %v315 = vld [vmem:[%s253 + $0x34] sm:$0xf]
      %v316 = vld [vmem:[%s253 + $0x38] sm:$0xf]
      %v317 = vld [vmem:[%s253 + $0x3c] sm:$0xf]
      %v318 = vld [vmem:[%s253 + $0x40] sm:$0xf]
      %v319 = vld [vmem:[%s253 + $0x44] sm:$0xf]
      %v320 = vld [vmem:[%s253 + $0x48] sm:$0xf]
      %v321 = vld [vmem:[%s253 + $0x4c] sm:$0xf]
      %v354 = vunpack.c.l.b16 %v270
      %v355 = vunpack.c.h.b16 %v270
      %v356 = vunpack.c.l.b16 %v271
      %v357 = vunpack.c.h.b16 %v271
      %v358 = vunpack.c.l.b16 %v272
      %v359 = vunpack.c.h.b16 %v272
      %v360 = vunpack.c.l.b16 %v273
      %v361 = vunpack.c.h.b16 %v273
      %v362 = vunpack.c.l.b16 %v274
      %v363 = vunpack.c.h.b16 %v274
      %v364 = vunpack.c.l.b16 %v275
      %v365 = vunpack.c.h.b16 %v275
      %v366 = vunpack.c.l.b16 %v276
      %v367 = vunpack.c.h.b16 %v276
      %v368 = vunpack.c.l.b16 %v277
      %v369 = vunpack.c.h.b16 %v277
      %v370 = vunpack.c.l.b16 %v278
      %v371 = vunpack.c.h.b16 %v278
      %v372 = vunpack.c.l.b16 %v279
      %v373 = vunpack.c.h.b16 %v279
      %v374 = vunpack.c.l.b16 %v280
      %v375 = vunpack.c.h.b16 %v280
      %v376 = vunpack.c.l.b16 %v281
      %v377 = vunpack.c.h.b16 %v281
      %v378 = vunpack.c.l.b16 %v282
      %v379 = vunpack.c.h.b16 %v282
      %v380 = vunpack.c.l.b16 %v283
      %v381 = vunpack.c.h.b16 %v283
      %v382 = vunpack.c.l.b16 %v284
      %v383 = vunpack.c.h.b16 %v284
      %v384 = vunpack.c.l.b16 %v285
      %v385 = vunpack.c.h.b16 %v285
      %v386 = vunpack.c.l.b16 %v286
      %v387 = vunpack.c.h.b16 %v286
      %v388 = vunpack.c.l.b16 %v287
      %v389 = vunpack.c.h.b16 %v287
      %v390 = vunpack.c.l.b16 %v288
      %v391 = vunpack.c.h.b16 %v288
      %v392 = vunpack.c.l.b16 %v289
      %v393 = vunpack.c.h.b16 %v289
      %v394 = vunpack.c.l.b16 %v290
      %v395 = vunpack.c.h.b16 %v290
      %v396 = vunpack.c.l.b16 %v291
      %v397 = vunpack.c.h.b16 %v291
      %v398 = vunpack.c.l.b16 %v292
      %v399 = vunpack.c.h.b16 %v292
      %v400 = vunpack.c.l.b16 %v293
      %v401 = vunpack.c.h.b16 %v293
      %v402 = vunpack.c.l.b16 %v294
      %v403 = vunpack.c.h.b16 %v294
      %v404 = vunpack.c.l.b16 %v295
      %v405 = vunpack.c.h.b16 %v295
      %v406 = vunpack.c.l.b16 %v296
      %v407 = vunpack.c.h.b16 %v296
      %v408 = vunpack.c.l.b16 %v297
      %v409 = vunpack.c.h.b16 %v297
      %v410 = vunpack.c.l.b16 %v298
      %v411 = vunpack.c.h.b16 %v298
      %v412 = vunpack.c.l.b16 %v299
      %v413 = vunpack.c.h.b16 %v299
      %v414 = vunpack.c.l.b16 %v300
      %v415 = vunpack.c.h.b16 %v300
      %v416 = vunpack.c.l.b16 %v301
      %v417 = vunpack.c.h.b16 %v301
      %v418 = vpack.c.b16 %v356, %v354
      %v419 = vpack.c.b16 %v357, %v355
      %v420 = vpack.c.b16 %v360, %v358
      %v421 = vpack.c.b16 %v361, %v359
      %v422 = vpack.c.b16 %v364, %v362
      %v423 = vpack.c.b16 %v365, %v363
      %v424 = vpack.c.b16 %v368, %v366
      %v425 = vpack.c.b16 %v369, %v367
      %v426 = vpack.c.b16 %v372, %v370
      %v427 = vpack.c.b16 %v373, %v371
      %v428 = vpack.c.b16 %v376, %v374
      %v429 = vpack.c.b16 %v377, %v375
      %v430 = vpack.c.b16 %v380, %v378
      %v431 = vpack.c.b16 %v381, %v379
      %v432 = vpack.c.b16 %v384, %v382
      %v433 = vpack.c.b16 %v385, %v383
      %v434 = vpack.c.b16 %v388, %v386
      %v435 = vpack.c.b16 %v389, %v387
      %v436 = vpack.c.b16 %v392, %v390
      %v437 = vpack.c.b16 %v393, %v391
      %v438 = vpack.c.b16 %v396, %v394
      %v439 = vpack.c.b16 %v397, %v395
      %v440 = vpack.c.b16 %v400, %v398
      %v441 = vpack.c.b16 %v401, %v399
      %v442 = vpack.c.b16 %v404, %v402
      %v443 = vpack.c.b16 %v405, %v403
      %v444 = vpack.c.b16 %v408, %v406
      %v445 = vpack.c.b16 %v409, %v407
      %v446 = vpack.c.b16 %v412, %v410
      %v447 = vpack.c.b16 %v413, %v411
      %v448 = vpack.c.b16 %v416, %v414
      %v449 = vpack.c.b16 %v417, %v415
      %v486 = vunpack.c.l.b16 %v302
      %v487 = vunpack.c.l.b16 %v303
      %v488 = vunpack.c.l.b16 %v304
      %v489 = vunpack.c.l.b16 %v305
      %v490 = vunpack.c.l.b16 %v306
      %v491 = vunpack.c.l.b16 %v307
      %v492 = vunpack.c.l.b16 %v308
      %v493 = vunpack.c.l.b16 %v309
      %v494 = vunpack.c.l.b16 %v310
      %v495 = vunpack.c.l.b16 %v311
      %v496 = vunpack.c.l.b16 %v312
      %v497 = vunpack.c.l.b16 %v313
      %v498 = vunpack.c.l.b16 %v314
      %v499 = vunpack.c.l.b16 %v315
      %v500 = vunpack.c.l.b16 %v316
      %v501 = vunpack.c.l.b16 %v317
      %v502 = vunpack.c.l.b16 %v318
      %v503 = vunpack.c.l.b16 %v319
      %v504 = vunpack.c.l.b16 %v320
      %v505 = vunpack.c.l.b16 %v321
      %v506 = vpack.c.b16 %v487, %v486
      %v507 = vpack.c.b16 %v489, %v488
      %v508 = vpack.c.b16 %v491, %v490
      %v509 = vpack.c.b16 %v493, %v492
      %v510 = vpack.c.b16 %v495, %v494
      %v511 = vpack.c.b16 %v497, %v496
      %v512 = vpack.c.b16 %v499, %v498
      %v513 = vpack.c.b16 %v501, %v500
      %v514 = vpack.c.b16 %v503, %v502
      %v515 = vpack.c.b16 %v505, %v504
      %vm526 = vcmask 261120
      %v528 = vsel %vm526, %v419, 0
      %v531 = vsel %vm526, %v421, 0
      %v534 = vsel %vm526, %v423, 0
      %v537 = vsel %vm526, %v425, 0
      %v540 = vsel %vm526, %v427, 0
      %v543 = vsel %vm526, %v429, 0
      %v546 = vsel %vm526, %v431, 0
      %v549 = vsel %vm526, %v433, 0
      %v552 = vsel %vm526, %v435, 0
      %v555 = vsel %vm526, %v437, 0
      %v558 = vsel %vm526, %v439, 0
      %v561 = vsel %vm526, %v441, 0
      %v564 = vsel %vm526, %v443, 0
      %v567 = vsel %vm526, %v445, 0
      %v570 = vsel %vm526, %v447, 0
      %v573 = vsel %vm526, %v449, 0
      %575 = vmatpush.bf16.msra.mxu0 %v513
      %576 = vmatpush.bf16.msra.mxu0 %v512
      %577 = vmatpush.bf16.msra.mxu0 %v511
      %578 = vmatpush.bf16.msra.mxu0 %v510
      %579 = vmatpush.bf16.msra.mxu0 %v509
      %580 = vmatpush.bf16.msra.mxu0 %v508
      %581 = vmatpush.bf16.msra.mxu0 %v507
      %582 = vmatpush.bf16.msra.mxu0 %v506
      %583 = vmatmul.bf16.gmra.mxu0 %v418
      %v584 = vpop.f32.mrf.mxu0
      %v585 = vadd.f32 0.0, %v584
      %v586 = vpop.f32.mrf.mxu0
      %v587 = vadd.f32 0.0, %v586
      %588 = vmatmul.bf16.gmra.mxu0 %v420
      %v589 = vpop.f32.mrf.mxu0
      %v590 = vadd.f32 0.0, %v589
      %v591 = vpop.f32.mrf.mxu0
      %v592 = vadd.f32 0.0, %v591
      %593 = vmatmul.bf16.gmra.mxu0 %v422
      %v594 = vpop.f32.mrf.mxu0
      %v595 = vadd.f32 0.0, %v594
      %v596 = vpop.f32.mrf.mxu0
      %v597 = vadd.f32 0.0, %v596
      %598 = vmatmul.bf16.gmra.mxu0 %v424
      %v599 = vpop.f32.mrf.mxu0
      %v600 = vadd.f32 0.0, %v599
      %v601 = vpop.f32.mrf.mxu0
      %v602 = vadd.f32 0.0, %v601
      %603 = vmatmul.bf16.gmra.mxu0 %v426
      %v604 = vpop.f32.mrf.mxu0
      %v605 = vadd.f32 0.0, %v604
      %v606 = vpop.f32.mrf.mxu0
      %v607 = vadd.f32 0.0, %v606
      %608 = vmatmul.bf16.gmra.mxu0 %v428
      %v609 = vpop.f32.mrf.mxu0
      %v610 = vadd.f32 0.0, %v609
      %v611 = vpop.f32.mrf.mxu0
      %v612 = vadd.f32 0.0, %v611
      %613 = vmatmul.bf16.gmra.mxu0 %v430
      %v614 = vpop.f32.mrf.mxu0
      %v615 = vadd.f32 0.0, %v614
      %v616 = vpop.f32.mrf.mxu0
      %v617 = vadd.f32 0.0, %v616
      %618 = vmatmul.bf16.gmra.mxu0 %v432
      %v619 = vpop.f32.mrf.mxu0
      %v620 = vadd.f32 0.0, %v619
      %v621 = vpop.f32.mrf.mxu0
      %v622 = vadd.f32 0.0, %v621
      %623 = vmatmul.bf16.gmra.mxu0 %v434
      %v624 = vpop.f32.mrf.mxu0
      %v625 = vadd.f32 0.0, %v624
      %v626 = vpop.f32.mrf.mxu0
      %v627 = vadd.f32 0.0, %v626
      %628 = vmatmul.bf16.gmra.mxu0 %v436
      %v629 = vpop.f32.mrf.mxu0
      %v630 = vadd.f32 0.0, %v629
      %v631 = vpop.f32.mrf.mxu0
      %v632 = vadd.f32 0.0, %v631
      %633 = vmatmul.bf16.gmra.mxu0 %v438
      %v634 = vpop.f32.mrf.mxu0
      %v635 = vadd.f32 0.0, %v634
      %v636 = vpop.f32.mrf.mxu0
      %v637 = vadd.f32 0.0, %v636
      %638 = vmatmul.bf16.gmra.mxu0 %v440
      %v639 = vpop.f32.mrf.mxu0
      %v640 = vadd.f32 0.0, %v639
      %v641 = vpop.f32.mrf.mxu0
      %v642 = vadd.f32 0.0, %v641
      %643 = vmatmul.bf16.gmra.mxu0 %v442
      %v644 = vpop.f32.mrf.mxu0
      %v645 = vadd.f32 0.0, %v644
      %v646 = vpop.f32.mrf.mxu0
      %v647 = vadd.f32 0.0, %v646
      %648 = vmatmul.bf16.gmra.mxu0 %v444
      %v649 = vpop.f32.mrf.mxu0
      %v650 = vadd.f32 0.0, %v649
      %v651 = vpop.f32.mrf.mxu0
      %v652 = vadd.f32 0.0, %v651
      %653 = vmatmul.bf16.gmra.mxu0 %v446
      %v654 = vpop.f32.mrf.mxu0
      %v655 = vadd.f32 0.0, %v654
      %v656 = vpop.f32.mrf.mxu0
      %v657 = vadd.f32 0.0, %v656
      %658 = vmatmul.bf16.gmra.mxu0 %v448
      %v659 = vpop.f32.mrf.mxu0
      %v660 = vadd.f32 0.0, %v659
      %v661 = vpop.f32.mrf.mxu0
      %v662 = vadd.f32 0.0, %v661
      %663 = vdwg.mxu0
      %664 = vmatpush.bf16.msra.mxu0 0
      %665 = vmatpush.bf16.msra.mxu0 0
      %666 = vmatpush.bf16.msra.mxu0 0
      %667 = vmatpush.bf16.msra.mxu0 0
      %668 = vmatpush.bf16.msra.mxu0 0
      %669 = vmatpush.bf16.msra.mxu0 0
      %670 = vmatpush.bf16.msra.mxu0 %v515
      %671 = vmatpush.bf16.msra.mxu0 %v514
      %672 = vmatmul.bf16.gmra.mxu0 %v528
      %v673 = vpop.f32.mrf.mxu0
      %v674 = vadd.f32 %v585, %v673
      %v675 = vpop.f32.mrf.mxu0
      %v676 = vadd.f32 %v587, %v675
      %677 = vmatmul.bf16.gmra.mxu0 %v531
      %v678 = vpop.f32.mrf.mxu0
      %v679 = vadd.f32 %v590, %v678
      %v680 = vpop.f32.mrf.mxu0
      %v681 = vadd.f32 %v592, %v680
      %682 = vmatmul.bf16.gmra.mxu0 %v534
      %v683 = vpop.f32.mrf.mxu0
      %v684 = vadd.f32 %v595, %v683
      %v685 = vpop.f32.mrf.mxu0
      %v686 = vadd.f32 %v597, %v685
      %687 = vmatmul.bf16.gmra.mxu0 %v537
      %v688 = vpop.f32.mrf.mxu0
      %v689 = vadd.f32 %v600, %v688
      %v690 = vpop.f32.mrf.mxu0
      %v691 = vadd.f32 %v602, %v690
      %692 = vmatmul.bf16.gmra.mxu0 %v540
      %v693 = vpop.f32.mrf.mxu0
      %v694 = vadd.f32 %v605, %v693
      %v695 = vpop.f32.mrf.mxu0
      %v696 = vadd.f32 %v607, %v695
      %697 = vmatmul.bf16.gmra.mxu0 %v543
      %v698 = vpop.f32.mrf.mxu0
      %v699 = vadd.f32 %v610, %v698
      %v700 = vpop.f32.mrf.mxu0
      %v701 = vadd.f32 %v612, %v700
      %702 = vmatmul.bf16.gmra.mxu0 %v546
      %v703 = vpop.f32.mrf.mxu0
      %v704 = vadd.f32 %v615, %v703
      %v705 = vpop.f32.mrf.mxu0
      %v706 = vadd.f32 %v617, %v705
      %707 = vmatmul.bf16.gmra.mxu0 %v549
      %v708 = vpop.f32.mrf.mxu0
      %v709 = vadd.f32 %v620, %v708
      %v710 = vpop.f32.mrf.mxu0
      %v711 = vadd.f32 %v622, %v710
      %712 = vmatmul.bf16.gmra.mxu0 %v552
      %v713 = vpop.f32.mrf.mxu0
      %v714 = vadd.f32 %v625, %v713
      %v715 = vpop.f32.mrf.mxu0
      %v716 = vadd.f32 %v627, %v715
      %717 = vmatmul.bf16.gmra.mxu0 %v555
      %v718 = vpop.f32.mrf.mxu0
      %v719 = vadd.f32 %v630, %v718
      %v720 = vpop.f32.mrf.mxu0
      %v721 = vadd.f32 %v632, %v720
      %722 = vmatmul.bf16.gmra.mxu0 %v558
      %v723 = vpop.f32.mrf.mxu0
      %v724 = vadd.f32 %v635, %v723
      %v725 = vpop.f32.mrf.mxu0
      %v726 = vadd.f32 %v637, %v725
      %727 = vmatmul.bf16.gmra.mxu0 %v561
      %v728 = vpop.f32.mrf.mxu0
      %v729 = vadd.f32 %v640, %v728
      %v730 = vpop.f32.mrf.mxu0
      %v731 = vadd.f32 %v642, %v730
      %732 = vmatmul.bf16.gmra.mxu0 %v564
      %v733 = vpop.f32.mrf.mxu0
      %v734 = vadd.f32 %v645, %v733
      %v735 = vpop.f32.mrf.mxu0
      %v736 = vadd.f32 %v647, %v735
      %737 = vmatmul.bf16.gmra.mxu0 %v567
      %v738 = vpop.f32.mrf.mxu0
      %v739 = vadd.f32 %v650, %v738
      %v740 = vpop.f32.mrf.mxu0
      %v741 = vadd.f32 %v652, %v740
      %742 = vmatmul.bf16.gmra.mxu0 %v570
      %v743 = vpop.f32.mrf.mxu0
      %v744 = vadd.f32 %v655, %v743
      %v745 = vpop.f32.mrf.mxu0
      %v746 = vadd.f32 %v657, %v745
      %747 = vmatmul.bf16.gmra.mxu0 %v573
      %v748 = vpop.f32.mrf.mxu0
      %v749 = vadd.f32 %v660, %v748
      %v750 = vpop.f32.mrf.mxu0
      %v751 = vadd.f32 %v662, %v750
      %752 = vdwg.mxu0
      %v753 = vld [vmem:[%s256] sm:$0x1]
      %v755 = vperm.slane %v753, 0
      %v757 = vmul.f32 %v674, %v755
      %v758 = vmul.f32 %v676, %v755
      %v759 = vmul.f32 %v679, %v755
      %v760 = vmul.f32 %v681, %v755
      %v761 = vmul.f32 %v684, %v755
      %v762 = vmul.f32 %v686, %v755
      %v763 = vmul.f32 %v689, %v755
      %v764 = vmul.f32 %v691, %v755
      %v765 = vmul.f32 %v694, %v755
      %v766 = vmul.f32 %v696, %v755
      %v767 = vmul.f32 %v699, %v755
      %v768 = vmul.f32 %v701, %v755
      %v769 = vmul.f32 %v704, %v755
      %v770 = vmul.f32 %v706, %v755
      %v771 = vmul.f32 %v709, %v755
      %v772 = vmul.f32 %v711, %v755
      %v773 = vmul.f32 %v714, %v755
      %v774 = vmul.f32 %v716, %v755
      %v775 = vmul.f32 %v719, %v755
      %v776 = vmul.f32 %v721, %v755
      %v777 = vmul.f32 %v724, %v755
      %v778 = vmul.f32 %v726, %v755
      %v779 = vmul.f32 %v729, %v755
      %v780 = vmul.f32 %v731, %v755
      %v781 = vmul.f32 %v734, %v755
      %v782 = vmul.f32 %v736, %v755
      %v783 = vmul.f32 %v739, %v755
      %v784 = vmul.f32 %v741, %v755
      %v785 = vmul.f32 %v744, %v755
      %v786 = vmul.f32 %v746, %v755
      %v787 = vmul.f32 %v749, %v755
      %v788 = vmul.f32 %v751, %v755
      %v789 = vld [vmem:[%s259] sm:$0x1]
      %v791 = vperm.slane %v789, 0
      %v793 = vadd.f32 %v757, %v791
      %v794 = vadd.f32 %v758, %v791
      %v795 = vadd.f32 %v759, %v791
      %v796 = vadd.f32 %v760, %v791
      %v797 = vadd.f32 %v761, %v791
      %v798 = vadd.f32 %v762, %v791
      %v799 = vadd.f32 %v763, %v791
      %v800 = vadd.f32 %v764, %v791
      %v801 = vadd.f32 %v765, %v791
      %v802 = vadd.f32 %v766, %v791
      %v803 = vadd.f32 %v767, %v791
      %v804 = vadd.f32 %v768, %v791
      %v805 = vadd.f32 %v769, %v791
      %v806 = vadd.f32 %v770, %v791
      %v807 = vadd.f32 %v771, %v791
      %v808 = vadd.f32 %v772, %v791
      %v809 = vadd.f32 %v773, %v791
      %v810 = vadd.f32 %v774, %v791
      %v811 = vadd.f32 %v775, %v791
      %v812 = vadd.f32 %v776, %v791
      %v813 = vadd.f32 %v777, %v791
      %v814 = vadd.f32 %v778, %v791
      %v815 = vadd.f32 %v779, %v791
      %v816 = vadd.f32 %v780, %v791
      %v817 = vadd.f32 %v781, %v791
      %v818 = vadd.f32 %v782, %v791
      %v819 = vadd.f32 %v783, %v791
      %v820 = vadd.f32 %v784, %v791
      %v821 = vadd.f32 %v785, %v791
      %v822 = vadd.f32 %v786, %v791
      %v823 = vadd.f32 %v787, %v791
      %v824 = vadd.f32 %v788, %v791
      %v825 = vmax.f32 %v793, 0.0
      %v826 = vmax.f32 %v794, 0.0
      %v827 = vmax.f32 %v795, 0.0
      %v828 = vmax.f32 %v796, 0.0
      %v829 = vmax.f32 %v797, 0.0
      %v830 = vmax.f32 %v798, 0.0
      %v831 = vmax.f32 %v799, 0.0
      %v832 = vmax.f32 %v800, 0.0
      %v833 = vmax.f32 %v801, 0.0
      %v834 = vmax.f32 %v802, 0.0
      %v835 = vmax.f32 %v803, 0.0
      %v836 = vmax.f32 %v804, 0.0
      %v837 = vmax.f32 %v805, 0.0
      %v838 = vmax.f32 %v806, 0.0
      %v839 = vmax.f32 %v807, 0.0
      %v840 = vmax.f32 %v808, 0.0
      %v841 = vmax.f32 %v809, 0.0
      %v842 = vmax.f32 %v810, 0.0
      %v843 = vmax.f32 %v811, 0.0
      %v844 = vmax.f32 %v812, 0.0
      %v845 = vmax.f32 %v813, 0.0
      %v846 = vmax.f32 %v814, 0.0
      %v847 = vmax.f32 %v815, 0.0
      %v848 = vmax.f32 %v816, 0.0
      %v849 = vmax.f32 %v817, 0.0
      %v850 = vmax.f32 %v818, 0.0
      %v851 = vmax.f32 %v819, 0.0
      %v852 = vmax.f32 %v820, 0.0
      %v853 = vmax.f32 %v821, 0.0
      %v854 = vmax.f32 %v822, 0.0
      %v855 = vmax.f32 %v823, 0.0
      %v856 = vmax.f32 %v824, 0.0
      %v857 = vpack.c.bf16 %v825, %v825
      %v858 = vpack.c.bf16 %v826, %v826
      %v859 = vpack.c.bf16 %v827, %v827
      %v860 = vpack.c.bf16 %v828, %v828
      %v861 = vpack.c.bf16 %v829, %v829
      %v862 = vpack.c.bf16 %v830, %v830
      %v863 = vpack.c.bf16 %v831, %v831
      %v864 = vpack.c.bf16 %v832, %v832
      %v865 = vpack.c.bf16 %v833, %v833
      %v866 = vpack.c.bf16 %v834, %v834
      %v867 = vpack.c.bf16 %v835, %v835
      %v868 = vpack.c.bf16 %v836, %v836
      %v869 = vpack.c.bf16 %v837, %v837
      %v870 = vpack.c.bf16 %v838, %v838
      %v871 = vpack.c.bf16 %v839, %v839
      %v872 = vpack.c.bf16 %v840, %v840
      %v873 = vpack.c.bf16 %v841, %v841
      %v874 = vpack.c.bf16 %v842, %v842
      %v875 = vpack.c.bf16 %v843, %v843
      %v876 = vpack.c.bf16 %v844, %v844
      %v877 = vpack.c.bf16 %v845, %v845
      %v878 = vpack.c.bf16 %v846, %v846
      %v879 = vpack.c.bf16 %v847, %v847
      %v880 = vpack.c.bf16 %v848, %v848
      %v881 = vpack.c.bf16 %v849, %v849
      %v882 = vpack.c.bf16 %v850, %v850
      %v883 = vpack.c.bf16 %v851, %v851
      %v884 = vpack.c.bf16 %v852, %v852
      %v885 = vpack.c.bf16 %v853, %v853
      %v886 = vpack.c.bf16 %v854, %v854
      %v887 = vpack.c.bf16 %v855, %v855
      %v888 = vpack.c.bf16 %v856, %v856
      %889 = vst [vmem:[%s267] sm:$0xf] %v857
      %890 = vst [vmem:[%s267 + $0x4] sm:$0xf] %v858
      %891 = vst [vmem:[%s267 + $0x8] sm:$0xf] %v859
      %892 = vst [vmem:[%s267 + $0xc] sm:$0xf] %v860
      %893 = vst [vmem:[%s267 + $0x10] sm:$0xf] %v861
      %894 = vst [vmem:[%s267 + $0x14] sm:$0xf] %v862
      %895 = vst [vmem:[%s267 + $0x18] sm:$0xf] %v863
      %896 = vst [vmem:[%s267 + $0x1c] sm:$0xf] %v864
      %897 = vst [vmem:[%s267 + $0x20] sm:$0xf] %v865
      %898 = vst [vmem:[%s267 + $0x24] sm:$0xf] %v866
      %899 = vst [vmem:[%s267 + $0x28] sm:$0xf] %v867
      %900 = vst [vmem:[%s267 + $0x2c] sm:$0xf] %v868
      %901 = vst [vmem:[%s267 + $0x30] sm:$0xf] %v869
      %902 = vst [vmem:[%s267 + $0x34] sm:$0xf] %v870
      %903 = vst [vmem:[%s267 + $0x38] sm:$0xf] %v871
      %904 = vst [vmem:[%s267 + $0x3c] sm:$0xf] %v872
      %905 = vst [vmem:[%s267 + $0x40] sm:$0xf] %v873
      %906 = vst [vmem:[%s267 + $0x44] sm:$0xf] %v874
      %907 = vst [vmem:[%s267 + $0x48] sm:$0xf] %v875
      %908 = vst [vmem:[%s267 + $0x4c] sm:$0xf] %v876
      %909 = vst [vmem:[%s267 + $0x50] sm:$0xf] %v877
      %910 = vst [vmem:[%s267 + $0x54] sm:$0xf] %v878
      %911 = vst [vmem:[%s267 + $0x58] sm:$0xf] %v879
      %912 = vst [vmem:[%s267 + $0x5c] sm:$0xf] %v880
      %913 = vst [vmem:[%s267 + $0x60] sm:$0xf] %v881
      %914 = vst [vmem:[%s267 + $0x64] sm:$0xf] %v882
      %915 = vst [vmem:[%s267 + $0x68] sm:$0xf] %v883
      %916 = vst [vmem:[%s267 + $0x6c] sm:$0xf] %v884
      %917 = vst [vmem:[%s267 + $0x70] sm:$0xf] %v885
      %918 = vst [vmem:[%s267 + $0x74] sm:$0xf] %v886
      %919 = vst [vmem:[%s267 + $0x78] sm:$0xf] %v887
      %920 = vst [vmem:[%s267 + $0x7c] sm:$0xf] %v888
      %s921 = smul.u32 32, %s19
      %p922 = scmp.lt.s32.totalorder %s921, 255
      %s923 = scalar_select %p922, %s921, 255
      %p924 = scmp.lt.s32.totalorder %s20, 0
      %s925 = scalar_select %p924, %s20, 0
      %s926 = sadd.s32 %s925, %s923
      %s927 = smul.addr %s926, 4
      %s928 = scalar_lea.vmem %s4, %s927
      // Predicated region
      $region37: #{matmul_affine.1} parent=35 // pred_check
        %p929 = pneg %p151
      $region38: #{matmul_affine.1} parent=35 // pred_check_branch
        %931 = sbr.rel (%p929) target = $region40
      $region39: #{matmul_affine.1} parent=35 // pred_region
        %s932 = smul.u32 32, %s19
      $region40: #{matmul_affine.1} parent=35 // pred_fallthru
        _
    $region36: #{matmul_affine.1} parent=5 // pred_fallthru
      _
    %p933 = scmp.le.s32.totalorder 2, %s10
    // Predicated region
    $region41: #{matmul_affine.1} parent=5 // pred_check
      %p934 = pneg %p933
    $region42: #{matmul_affine.1} parent=5 // pred_check_branch
      %936 = sbr.rel (%p934) target = $region44
    $region43: #{matmul_affine.1} parent=5 // pred_region
      %s937 = ssub.s32 %s10, 2
      // Predicated region
      $region45: #{matmul_affine.1} parent=43 // pred_check
        %p938 = pneg %p157
      $region46: #{matmul_affine.1} parent=43 // pred_check_branch
        %940 = sbr.rel (%p938) target = $region48
      $region47: #{matmul_affine.1} parent=43 // pred_region
        %s941 = smul.u32 32, %s21
        %p942 = scmp.lt.s32.totalorder %s941, 255
        %s943 = scalar_select %p942, %s941, 255
        %p944 = scmp.lt.s32.totalorder %s22, 0
        %s945 = scalar_select %p944, %s22, 0
        %s946 = sadd.s32 %s945, %s943
        %s947 = smul.addr %s946, 4
        %s948 = scalar_lea.vmem %s4, %s947
      $region48: #{matmul_affine.1} parent=43 // pred_fallthru
        _
    $region44: #{matmul_affine.1} parent=5 // pred_fallthru
      _
  $region6: #{matmul_affine.1} parent=0 // loop_footer
    %s14 = sadd.s32 1, %s10
  $region7: #{matmul_affine.1} parent=0 // loop_footer_branch
    %9 = sbr.rel target = $region3
  $region8: #{matmul_affine.1} parent=0 // loop_exit
    _

</llo_original>
